<compile_context>
chip_gen: v7x
topology: tpu7x:2x2x1
jax: 0.10.0
libtpu: 0.0.40
codegen_flags: <defaults>
</compile_context>

<pallas_src>
import functools

import jax
import jax.numpy as jnp
import numpy as np
from jax.experimental import pallas as pl
from jax.experimental.pallas import tpu as pltpu


def _ttm_block_kernel(ys_ref, yt_ref, out_ref, *, l, tile_n, n_valid):
    ys = ys_ref[...].astype(jnp.float32)   # (tile_n, C) student logits
    yt = yt_ref[...].astype(jnp.float32)   # (tile_n, C) teacher logits

    # Student: stable log-sum-exp pieces (no full log_softmax materialized).
    zs = ys - jnp.max(ys, axis=1, keepdims=True)
    lse_s = jnp.log(jnp.sum(jnp.exp(zs), axis=1, keepdims=True))

    # Tempered teacher: softmax(y_t)**l renormalized == softmax(l * y_t).
    lyt = l * yt
    zt = lyt - jnp.max(lyt, axis=1, keepdims=True)
    et = jnp.exp(zt)
    sum_et = jnp.sum(et, axis=1, keepdims=True)
    lse_t = jnp.log(sum_et)

    # Fused per-row KL:
    #   sum_c p_t * (log_p_t - log_p_s)
    # = sum_c (et/sum_et) * ((zt - lse_t) - (zs - lse_s))
    # = sum_c et*(zt - zs) / sum_et  +  lse_s - lse_t
    num = jnp.sum(et * (zt - zs), axis=1, keepdims=True)
    row_kl = num * (1.0 / sum_et) + (lse_s - lse_t)          # (tile_n, 1)

    # Mask invalid rows of the ragged last block (select, NOT multiply, so
    # undefined/NaN data in out-of-bounds rows cannot leak into the sum).
    if n_valid is not None:
        row0 = pl.program_id(0) * tile_n
        rows = row0 + jax.lax.broadcasted_iota(jnp.int32, (tile_n, 1), 0)
        row_kl = jnp.where(rows < n_valid, row_kl, 0.0)

    # Lane-dense (1, 8, 128) output block; wrapper reads [i, 0, 0].
    out_ref[...] = jnp.full(out_ref.shape, jnp.sum(row_kl), dtype=jnp.float32)


def ttm_loss(y_s, y_t, l, *, tile_n=None):
    """Pallas TTM loss. y_s, y_t: (N, C) logits (f32 / bf16). Returns f32 scalar."""
    assert y_s.shape == y_t.shape and y_s.ndim == 2
    n, c = y_s.shape
    itemsize = jnp.dtype(y_s.dtype).itemsize

    # Native sublane packing: 8 rows (32-bit), 16 (16-bit), 32 (8-bit).
    pack = 8 if itemsize >= 4 else (16 if itemsize == 2 else 32)

    # Scoped VMEM budget re-derived per generation (v7x has only 64 MiB/TC).
    try:
        vmem_cap = int(pltpu.get_tpu_info().vmem_capacity_bytes)
    except Exception:  # pragma: no cover - conservative fallback off-TPU
        vmem_cap = 64 << 20
    vmem_limit = int(min(64 << 20, (vmem_cap * 3) // 4))

    if tile_n is None:
        # Per-input block budget in f32 terms:
        #   2 inputs x 2 pipeline buffers + a few live f32 temporaries stays
        #   well inside vmem_limit (~4 MiB blocks on 128 MiB parts, ~3 MiB on
        #   v7x's 64 MiB part).
        budget = max(1 << 20, vmem_limit // 16)
        tile_n = max(pack, (budget // max(1, c * 4)) // pack * pack)
        # Keep the grid >= ~8 steps when the batch allows it (pipeline depth,
        # and lets v7x's two TensorCores split the "parallel" axis).
        min_steps = 8
        cap = -(-pl.cdiv(n, min_steps) // pack) * pack
        tile_n = min(tile_n, max(pack, cap))
    else:
        tile_n = max(pack, -(-int(tile_n) // pack) * pack)

    # Never exceed the (sublane-padded) batch size.
    tile_n = min(tile_n, -(-n // pack) * pack)

    grid = pl.cdiv(n, tile_n)
    mask_needed = (n % tile_n) != 0

    kernel = functools.partial(
        _ttm_block_kernel,
        l=float(l),
        tile_n=tile_n,
        n_valid=(n if mask_needed else None),
    )

    partials = pl.pallas_call(
        kernel,
        out_shape=jax.ShapeDtypeStruct((grid, 8, 128), jnp.float32),
        grid=(grid,),
        in_specs=[
            pl.BlockSpec((tile_n, c), lambda i: (i, 0)),
            pl.BlockSpec((tile_n, c), lambda i: (i, 0)),
        ],
        out_specs=pl.BlockSpec((1, 8, 128), lambda i: (i, 0, 0)),
        compiler_params=pltpu.CompilerParams(
            dimension_semantics=("parallel",),
            vmem_limit_bytes=vmem_limit,
        ),
    )(y_s, y_t)

    total = jnp.sum(partials[:, 0, 0])
    return total * (1.0 / n)   # mean over the TRUE batch size


def ttm_loss_ref(y_s, y_t, l):
    """Pure-JAX reference (mirrors the PyTorch module literally)."""
    log_p_s = jax.nn.log_softmax(y_s.astype(jnp.float32), axis=1)
    p_t = jax.nn.softmax(y_t.astype(jnp.float32), axis=1) ** l
    p_t = p_t / jnp.sum(p_t, axis=1, keepdims=True)
    kl = p_t * (jnp.log(p_t) - log_p_s)
    return jnp.mean(jnp.sum(kl, axis=1))


if __name__ == "__main__":
    key = jax.random.PRNGKey(0)
    k1, k2, k3, k4, k5, k6 = jax.random.split(key, 6)
    l_param = 0.5  # TTM temperature-like exponent (module __init__ arg)

    # Primary small test: batch=8, classes=128, f32, single block.
    N, C = 8, 128
    y_s = jax.random.normal(k1, (N, C), dtype=jnp.float32)
    y_t = jax.random.normal(k2, (N, C), dtype=jnp.float32)
    loss = jax.block_until_ready(ttm_loss(y_s, y_t, l_param))
    loss_ref = jax.block_until_ready(ttm_loss_ref(y_s, y_t, l_param))
    np.testing.assert_allclose(np.asarray(loss), np.asarray(loss_ref),
                               rtol=1e-5, atol=1e-5)

    # Ragged batch + bf16 inputs (exercises in-kernel masking of a ragged last
    # block WITHOUT wrapper-side padding, bf16 16-row packing, in-kernel cast).
    N2, C2 = 20, 128
    y_s2 = jax.random.normal(k3, (N2, C2), dtype=jnp.bfloat16)
    y_t2 = jax.random.normal(k4, (N2, C2), dtype=jnp.bfloat16)
    loss2 = jax.block_until_ready(ttm_loss(y_s2, y_t2, l_param))
    loss2_ref = jax.block_until_ready(ttm_loss_ref(y_s2, y_t2, l_param))
    np.testing.assert_allclose(np.asarray(loss2), np.asarray(loss2_ref),
                               rtol=1e-4, atol=1e-5)

    # Multi-block grid with a masked last block, f32 (grid ~ 8 steps).
    N3, C3 = 300, 256
    y_s3 = jax.random.normal(k5, (N3, C3), dtype=jnp.float32)
    y_t3 = jax.random.normal(k6, (N3, C3), dtype=jnp.float32)
    loss3 = jax.block_until_ready(ttm_loss(y_s3, y_t3, l_param))
    loss3_ref = jax.block_until_ready(ttm_loss_ref(y_s3, y_t3, l_param))
    np.testing.assert_allclose(np.asarray(loss3), np.asarray(loss3_ref),
                               rtol=1e-5, atol=1e-5)

    print("KERNEL_OK")
</pallas_src>

<mosaic_0001>
module attributes {stable_mosaic.version = 11 : i64} {
  func.func @_ttm_block_kernel(%arg0: i32, %arg1: memref<8x128xf32, #tpu.memory_space<vmem>>, %arg2: memref<8x128xf32, #tpu.memory_space<vmem>>, %arg3: memref<1x8x128xf32, #tpu.memory_space<vmem>>) attributes {dimension_semantics = [#tpu.dimension_semantics<parallel>], iteration_bounds = array<i64: 1>, scalar_prefetch = 0 : i64, scratch_operands = 0 : i64, tpu.core_type = #tpu.core_type<tc>, window_params = [{transform_indices = @transform_0, window_bounds = array<i64: 8, 128>}, {transform_indices = @transform_1, window_bounds = array<i64: 8, 128>}, {transform_indices = @transform_2, window_bounds = array<i64: 1, 8, 128>}]} {
    %c0 = arith.constant 0 : index
    %c0_0 = arith.constant 0 : index
    %0 = vector.load %arg1[%c0, %c0_0] : memref<8x128xf32, #tpu.memory_space<vmem>>, vector<8x128xf32>
    %c0_1 = arith.constant 0 : index
    %c0_2 = arith.constant 0 : index
    %1 = vector.load %arg2[%c0_1, %c0_2] : memref<8x128xf32, #tpu.memory_space<vmem>>, vector<8x128xf32>
    %cst = arith.constant dense<0xFF800000> : vector<8xf32>
    %2 = vector.multi_reduction <maximumf>, %0, %cst [1] : vector<8x128xf32> to vector<8xf32>
    %3 = vector.shape_cast %2 : vector<8xf32> to vector<8x1xf32>
    %4 = vector.broadcast %3 : vector<8x1xf32> to vector<8x128xf32>
    %5 = arith.subf %0, %4 : vector<8x128xf32>
    %6 = math.exp %5 : vector<8x128xf32>
    %cst_3 = arith.constant dense<0.000000e+00> : vector<8xf32>
    %7 = vector.multi_reduction <add>, %6, %cst_3 [1] : vector<8x128xf32> to vector<8xf32>
    %8 = vector.shape_cast %7 : vector<8xf32> to vector<8x1xf32>
    %9 = math.log %8 : vector<8x1xf32>
    %cst_4 = arith.constant 5.000000e-01 : f32
    %10 = vector.broadcast %cst_4 : f32 to vector<8x128xf32>
    %11 = arith.mulf %10, %1 : vector<8x128xf32>
    %cst_5 = arith.constant dense<0xFF800000> : vector<8xf32>
    %12 = vector.multi_reduction <maximumf>, %11, %cst_5 [1] : vector<8x128xf32> to vector<8xf32>
    %13 = vector.shape_cast %12 : vector<8xf32> to vector<8x1xf32>
    %14 = vector.broadcast %13 : vector<8x1xf32> to vector<8x128xf32>
    %15 = arith.subf %11, %14 : vector<8x128xf32>
    %16 = math.exp %15 : vector<8x128xf32>
    %cst_6 = arith.constant dense<0.000000e+00> : vector<8xf32>
    %17 = vector.multi_reduction <add>, %16, %cst_6 [1] : vector<8x128xf32> to vector<8xf32>
    %18 = vector.shape_cast %17 : vector<8xf32> to vector<8x1xf32>
    %19 = math.log %18 : vector<8x1xf32>
    %20 = arith.subf %15, %5 : vector<8x128xf32>
    %21 = arith.mulf %16, %20 : vector<8x128xf32>
    %cst_7 = arith.constant dense<0.000000e+00> : vector<8xf32>
    %22 = vector.multi_reduction <add>, %21, %cst_7 [1] : vector<8x128xf32> to vector<8xf32>
    %23 = vector.shape_cast %22 : vector<8xf32> to vector<8x1xf32>
    %cst_8 = arith.constant 1.000000e+00 : f32
    %24 = vector.broadcast %cst_8 : f32 to vector<8x1xf32>
    %25 = arith.divf %24, %18 : vector<8x1xf32>
    %26 = arith.mulf %23, %25 : vector<8x1xf32>
    %27 = arith.subf %9, %19 : vector<8x1xf32>
    %28 = arith.addf %26, %27 : vector<8x1xf32>
    %29 = vector.shape_cast %28 : vector<8x1xf32> to vector<1x8x1xf32>
    %cst_9 = arith.constant dense<0.000000e+00> : vector<1xf32>
    %30 = vector.multi_reduction <add>, %29, %cst_9 [1, 2] : vector<1x8x1xf32> to vector<1xf32>
    %31 = vector.shape_cast %30 : vector<1xf32> to vector<1x1x1xf32>
    %32 = vector.extract %31[0, 0, 0] : f32 from vector<1x1x1xf32>
    %33 = vector.broadcast %32 : f32 to vector<1x8x128xf32>
    %c0_10 = arith.constant 0 : index
    %c0_11 = arith.constant 0 : index
    %c0_12 = arith.constant 0 : index
    %34 = vector.load %arg3[%c0_10, %c0_11, %c0_12] : memref<1x8x128xf32, #tpu.memory_space<vmem>>, vector<1x8x128xf32>
    tpu.vector_store %arg3[%c0_10, %c0_11, %c0_12], %33 {strides = array<i32>} : memref<1x8x128xf32, #tpu.memory_space<vmem>>, vector<1x8x128xf32>,
    return
  }
  func.func @transform_0(%arg0: i32) -> (i32, i32) {
    %c0_i32 = arith.constant 0 : i32
    %c0_i32_0 = arith.constant 0 : i32
    return %arg0, %c0_i32 : i32, i32
  }
  func.func @transform_1(%arg0: i32) -> (i32, i32) {
    %c0_i32 = arith.constant 0 : i32
    %c0_i32_0 = arith.constant 0 : i32
    return %arg0, %c0_i32 : i32, i32
  }
  func.func @transform_2(%arg0: i32) -> (i32, i32, i32) {
    %c0_i32 = arith.constant 0 : i32
    %c0_i32_0 = arith.constant 0 : i32
    %c0_i32_1 = arith.constant 0 : i32
    return %arg0, %c0_i32, %c0_i32_0 : i32, i32, i32
  }
}

</mosaic_0001>

<llo_original>
// kernel: tpu_custom_call.1
$region0: #{tpu_custom_call.1}
  #allocation0 [shape = 'u32[]', space=smem, size = 0x4, offset = 0x4, fixed_abs, tag = 'smem constant byte address 0x4 - core index']
  #allocation1 [shape = 'u32[144,128]{1,0:T(1,128)}', space=vmem, size = 0x12000, scoped, tag = 'internal scratch']
  %s0 = inlined_call_operand.hbm [shape: f32[8,128], index: 0, kind: input, shape index: {}]
  %s1 = inlined_call_operand.hbm [shape: f32[8,128], index: 1, kind: input, shape index: {}]
  %s2 = inlined_call_operand.hbm [shape: f32[1,8,128], index: 2, kind: output, shape index: {}]
  %s3 = sld [smem:[#allocation0]]
  $region26: #{tpu_custom_call.1} parent=0
    _
  %s5 = ssub.s32 1, %s3
  %s6 = scalar_select 0, %s5, %s3
  $region1: #{tpu_custom_call.1} parent=0
    #allocation2 [shape = 'u8[4096]{0}', space=vmem, size = 0x1000, scoped, tag = 'input window, operand 0, single buffered']
    #allocation3 [shape = 's32[1]{0}', space=sflag, size = 0x4, scoped, tag = 'scoped memory for tpu_custom_call.1']
    #allocation4 [shape = 's32[1]{0}', space=sflag, size = 0x4, scoped, tag = 'scoped memory for tpu_custom_call.1']
    #allocation5 [shape = 'u8[4096]{0}', space=vmem, size = 0x1000, scoped, tag = 'input window, operand 1, single buffered']
    #allocation6 [shape = 's32[1]{0}', space=sflag, size = 0x4, scoped, tag = 'scoped memory for tpu_custom_call.1']
    #allocation7 [shape = 'u8[4096]{0}', space=vmem, size = 0x1000, scoped, tag = 'output window, operand 0, single buffered']
    %7 = vsyncpa [#allocation3], 0
    %8 = vsyncpa [#allocation6], 0
    %9 = vsyncpa [#allocation4], 0
    // Predicated region
    $region2: #{tpu_custom_call.1} parent=1 // pred_check
      _
    $region3: #{tpu_custom_call.1} parent=1 // pred_check_branch
      %11 = sbr.rel (0) target = $region5
    $region4: #{tpu_custom_call.1} parent=1 // pred_region
      %s13 = ssub.s32 128, 128
      %14 = vsyncadd [#allocation3], %s13
      %s16 = sshll.u32 [#allocation2], 4
      %s17 = int_to_ptr.vmem [resolvable:$true] %s16
      %19 = dma.hbm_to_vmem [thread:$0]  %s0, 128, %s17, [#allocation3]
    $region5: #{tpu_custom_call.1} parent=1 // pred_fallthru
      _
    // Predicated region
    $region6: #{tpu_custom_call.1} parent=1 // pred_check
      _
    $region7: #{tpu_custom_call.1} parent=1 // pred_check_branch
      %21 = sbr.rel (0) target = $region9
    $region8: #{tpu_custom_call.1} parent=1 // pred_region
      %s23 = ssub.s32 128, 128
      %24 = vsyncadd [#allocation6], %s23
      %s26 = sshll.u32 [#allocation5], 4
      %s27 = int_to_ptr.vmem [resolvable:$true] %s26
      %29 = dma.hbm_to_vmem [thread:$0]  %s1, 128, %s27, [#allocation6]
    $region9: #{tpu_custom_call.1} parent=1 // pred_fallthru
      _
    // Predicated region
    $region10: #{tpu_custom_call.1} parent=1 // pred_check
      _
    $region11: #{tpu_custom_call.1} parent=1 // pred_check_branch
      %31 = sbr.rel (0) target = $region13
    $region12: #{tpu_custom_call.1} parent=1 // pred_region
      %32 = dma.done [#allocation3], 128
    $region13: #{tpu_custom_call.1} parent=1 // pred_fallthru
      _
    // Predicated region
    $region14: #{tpu_custom_call.1} parent=1 // pred_check
      _
    $region15: #{tpu_custom_call.1} parent=1 // pred_check_branch
      %34 = sbr.rel (0) target = $region17
    $region16: #{tpu_custom_call.1} parent=1 // pred_region
      %35 = dma.done [#allocation6], 128
    $region17: #{tpu_custom_call.1} parent=1 // pred_fallthru
      _
    %v36 = vld [vmem:[#allocation2] sm:$0xff]
    %v37 = vld [vmem:[#allocation5] sm:$0xff]
    %38 = vmax.xlane.f32.xlu0 %v36
    %v39 = vpop.xlane.xlu0 %38
    %v40 = vsub.f32 %v36, %v39
    %v41 = vmul.f32 %v40, 1.442695
    %v42 = vpow.pop %v41
    %43 = vadd.xlane.f32.xlu0 %v42
    %v44 = vpop.xlane.xlu0 %43
    %v45 = vlog2.pop %v44
    %v46 = vmul.f32 %v45, 0.6931472
    %v47 = vmul.f32 %v37, 0.5
    %48 = vmax.xlane.f32.xlu0 %v47
    %v49 = vpop.xlane.xlu0 %48
    %v50 = vsub.f32 %v47, %v49
    %v51 = vmul.f32 %v50, 1.442695
    %v52 = vpow.pop %v51
    %53 = vadd.xlane.f32.xlu0 %v52
    %v54 = vpop.xlane.xlu0 %53
    %v55 = vlog2.pop %v54
    %v56 = vmul.f32 %v55, 0.6931472
    %v57 = vsub.f32 %v50, %v40
    %v58 = vmul.f32 %v52, %v57
    %59 = vadd.xlane.f32.xlu0 %v58
    %v60 = vpop.xlane.xlu0 %59
    %v61 = vrcp.pop %v54
    %v62 = vmul.f32 1.0, %v61
    %v63 = vmul.f32 %v60, %v62
    %v64 = vsub.f32 %v46, %v56
    %v65 = vadd.f32 %v63, %v64
    %vm66 = vcmask 7168
    %v67 = vsel %vm66, %v65, 0.0
    %68 = vadd.xlane.f32.xlu0 %v67
    %v69 = vpop.xlane.xlu0 %68
    %v70 = vrot.slane %v69, 4
    %v71 = vadd.f32 %v69, %v70
    %v72 = vrot.slane %v71, 2
    %v73 = vadd.f32 %v71, %v72
    %v74 = vrot.slane %v73, 1
    %v75 = vadd.f32 %v73, %v74
    %s76 = vtos %v75
    %v77 = vstv %s76
    %78 = vst [vmem:[#allocation7] sm:$0xff] %v77
    // Predicated region
    $region18: #{tpu_custom_call.1} parent=1 // pred_check
      _
    $region19: #{tpu_custom_call.1} parent=1 // pred_check_branch
      %80 = sbr.rel (0) target = $region21
    $region20: #{tpu_custom_call.1} parent=1 // pred_region
      %s82 = ssub.s32 128, 128
      %83 = vsyncadd [#allocation4], %s82
      %s85 = sshll.u32 [#allocation7], 4
      %s86 = int_to_ptr.vmem [resolvable:$true] %s85
      %88 = dma.vmem_to_hbm [thread:$0]  %s86, 128, %s2, [#allocation4]
    $region21: #{tpu_custom_call.1} parent=1 // pred_fallthru
      _
    // Predicated region
    $region22: #{tpu_custom_call.1} parent=1 // pred_check
      _
    $region23: #{tpu_custom_call.1} parent=1 // pred_check_branch
      %90 = sbr.rel (0) target = $region25
    $region24: #{tpu_custom_call.1} parent=1 // pred_region
      %91 = dma.done [#allocation4], 128
    $region25: #{tpu_custom_call.1} parent=1 // pred_fallthru
      _
    %92 = vsyncpa [#allocation3], 1
    %93 = vsyncpa [#allocation6], 1
    %94 = vsyncpa [#allocation4], 1

</llo_original>
